<compile_context>
chip_gen: v6e
topology: v6e:2x2x1
jax: 0.10.0
libtpu: 0.0.40
codegen_flags: <defaults>
</compile_context>

<pallas_src>
import jax
import jax.numpy as jnp
from jax.experimental import pallas as pl
from jax.experimental.pallas import tpu as pltpu


H1, H2, H3 = 128, 256, 512          # hidden widths fixed by the module
_BN_EPS = 1e-5
_OUT_LANES = 128                    # lane-dense output padding


def _round_up(n, m):
    return ((n + m - 1) // m) * m


# ----------------------------- kernel -----------------------------

def _mlp_kernel(x_ref,
                w1_ref, b1_ref,
                w2_ref, b2_ref,
                w3_ref, b3_ref,
                w4_ref, b4_ref,
                o_ref):
    # x arrives as f32 directly from HBM (no wrapper pad/convert pass);
    # cast to bf16 on the VPU, accumulate all matmuls in f32 on the MXU.
    x = x_ref[...].astype(jnp.bfloat16)

    h = jnp.dot(x, w1_ref[...], preferred_element_type=jnp.float32) + b1_ref[...]
    h = jnp.maximum(h, 0.0).astype(jnp.bfloat16)

    h = jnp.dot(h, w2_ref[...], preferred_element_type=jnp.float32) + b2_ref[...]
    h = jnp.maximum(h, 0.0).astype(jnp.bfloat16)

    h = jnp.dot(h, w3_ref[...], preferred_element_type=jnp.float32) + b3_ref[...]
    h = jnp.maximum(h, 0.0).astype(jnp.bfloat16)

    o_ref[...] = (jnp.dot(h, w4_ref[...], preferred_element_type=jnp.float32)
                  + b4_ref[...]).astype(o_ref.dtype)   # bf16 writeback


# --------------------- one-time parameter prep ---------------------

def prepare_params(params):
    """Fold eval-mode BatchNorm into the *following* linear layer, pad the output
    feature dim to a lane-dense multiple of 128, and cast weights to bf16.

    relu(fc_k(x))*s + t  then  @ W_{k+1}
        ==  relu(fc_k(x)) @ (s[:,None]*W_{k+1}) + (t @ W_{k+1} + b_{k+1})

    Call once; the returned dict feeds straight into stm_regression_forward.
    """
    def bn_scale_shift(g, be, m, v):
        s = g / jnp.sqrt(v + _BN_EPS)
        return s, be - m * s

    s1, t1 = bn_scale_shift(params["g1"], params["be1"], params["m1"], params["v1"])
    s2, t2 = bn_scale_shift(params["g2"], params["be2"], params["m2"], params["v2"])
    s3, t3 = bn_scale_shift(params["g3"], params["be3"], params["m3"], params["v3"])

    w1, b1 = params["w1"], params["b1"]
    w2 = s1[:, None] * params["w2"]
    b2 = params["b2"] + t1 @ params["w2"]
    w3 = s2[:, None] * params["w3"]
    b3 = params["b3"] + t2 @ params["w3"]
    w4 = s3[:, None] * params["w4"]
    b4 = params["b4"] + t3 @ params["w4"]

    output_dim = int(params["w4"].shape[1])
    out_pad = _round_up(max(output_dim, _OUT_LANES), _OUT_LANES)
    if out_pad != output_dim:
        w4 = jnp.pad(w4, ((0, 0), (0, out_pad - output_dim)))
        b4 = jnp.pad(b4, ((0, out_pad - output_dim),))

    # Fold/pad in f32, cast the final product to bf16; keep biases f32.
    prepared = dict(
        w1=w1.astype(jnp.bfloat16), b1=b1.astype(jnp.float32)[None, :],
        w2=w2.astype(jnp.bfloat16), b2=b2.astype(jnp.float32)[None, :],
        w3=w3.astype(jnp.bfloat16), b3=b3.astype(jnp.float32)[None, :],
        w4=w4.astype(jnp.bfloat16), b4=b4.astype(jnp.float32)[None, :],
    )
    return prepared, output_dim


# ----------------------------- forward -----------------------------

def stm_regression_forward(x, prepared, output_dim, *, tb=None):
    """Eval-mode forward. Returns (None, result) like the PyTorch module.

    x: [B, input_dim] float32, any B (ragged last tile handled by masked writes).
    prepared: output of prepare_params(). output_dim: un-padded output width.
    """
    B, input_dim = x.shape
    out_pad = prepared["w4"].shape[1]

    # Batch tile: multiple of 16 (bf16 sublane packing). Tiny batches take a
    # single step; larger batches get big MXU-friendly tiles up to 1024 rows,
    # capped so the grid has >= 2 steps (both TensorCores busy on v7x).
    if tb is None:
        if B <= 128:
            tb = _round_up(B, 16)
        else:
            tb = min(1024, _round_up(pl.cdiv(B, 2), 16))
    tb = max(16, _round_up(tb, 16))

    grid = (pl.cdiv(B, tb),)

    full = lambda shape: pl.BlockSpec(shape, lambda i: (0,) * len(shape))

    grid_spec = pltpu.PrefetchScalarGridSpec(
        num_scalar_prefetch=0,
        grid=grid,
        in_specs=[
            pl.BlockSpec((tb, input_dim), lambda i: (i, 0)),   # x tile (full K)
            full((input_dim, H1)), full((1, H1)),
            full((H1, H2)), full((1, H2)),
            full((H2, H3)), full((1, H3)),
            full((H3, out_pad)), full((1, out_pad)),
        ],
        out_specs=pl.BlockSpec((tb, out_pad), lambda i: (i, 0)),
    )

    flops = 2 * B * (input_dim * H1 + H1 * H2 + H2 * H3 + H3 * out_pad)
    bytes_accessed = (
        2 * (input_dim * H1 + H1 * H2 + H2 * H3 + H3 * out_pad)   # bf16 weights
        + 4 * (H1 + H2 + H3 + out_pad)                            # f32 biases
        + 4 * B * input_dim                                       # f32 x read
        + 2 * B * out_pad)                                        # bf16 out write

    out = pl.pallas_call(
        _mlp_kernel,
        out_shape=jax.ShapeDtypeStruct((B, out_pad), jnp.bfloat16),
        grid_spec=grid_spec,
        compiler_params=pltpu.CompilerParams(
            dimension_semantics=("parallel",),
            vmem_limit_bytes=64 * 1024 * 1024),
        cost_estimate=pl.CostEstimate(
            flops=int(flops), transcendentals=0,
            bytes_accessed=int(bytes_accessed)),
    )(x, prepared["w1"], prepared["b1"],
      prepared["w2"], prepared["b2"],
      prepared["w3"], prepared["b3"],
      prepared["w4"], prepared["b4"])

    result = out[:, :output_dim].astype(jnp.float32)

    # TODO(synk): `do_taylor` (SMPL pickle models + Tailor measurement tables)
    # has no in-script Pallas equivalent; the MLP regression head is returned.
    return None, result


# --------------------- synthetic params / reference ---------------------

def _init_params(key, input_dim, output_dim):
    """Deterministic synthetic parameters matching the module's __init__ shapes."""
    ks = jax.random.split(key, 16)

    def lin(kw, kb, din, dout):
        # PyTorch Linear stores W as [out, in]; we keep [in, out] for x @ W.
        w = jax.random.normal(kw, (din, dout), jnp.float32) * (1.0 / jnp.sqrt(din))
        b = jax.random.normal(kb, (dout,), jnp.float32) * 0.01
        return w, b

    w1, b1 = lin(ks[0], ks[1], input_dim, H1)
    w2, b2 = lin(ks[2], ks[3], H1, H2)
    w3, b3 = lin(ks[4], ks[5], H2, H3)
    w4, b4 = lin(ks[6], ks[7], H3, output_dim)

    def bn(kg, kb, km, kv, d):
        gamma = 1.0 + 0.1 * jax.random.normal(kg, (d,), jnp.float32)
        beta = 0.1 * jax.random.normal(kb, (d,), jnp.float32)
        mean = 0.05 * jax.random.normal(km, (d,), jnp.float32)
        var = jnp.abs(1.0 + 0.1 * jax.random.normal(kv, (d,), jnp.float32))
        return gamma, beta, mean, var

    g1, be1, m1, v1 = bn(ks[8], ks[9], ks[10], ks[11], H1)
    g2, be2, m2, v2 = bn(ks[12], ks[13], ks[14], ks[15], H2)
    k2 = jax.random.split(jax.random.fold_in(key, 123), 4)
    g3, be3, m3, v3 = bn(k2[0], k2[1], k2[2], k2[3], H3)

    return dict(w1=w1, b1=b1, w2=w2, b2=b2, w3=w3, b3=b3, w4=w4, b4=b4,
                g1=g1, be1=be1, m1=m1, v1=v1,
                g2=g2, be2=be2, m2=m2, v2=v2,
                g3=g3, be3=be3, m3=m3, v3=v3)


def _reference(x, params):
    """Pure-JAX f32 reference of the eval-mode forward for validation."""
    def bn(h, g, b, m, v, eps=_BN_EPS):
        return (h - m) / jnp.sqrt(v + eps) * g + b
    h = jnp.maximum(x @ params["w1"] + params["b1"], 0.0)
    h = bn(h, params["g1"], params["be1"], params["m1"], params["v1"])
    h = jnp.maximum(h @ params["w2"] + params["b2"], 0.0)
    h = bn(h, params["g2"], params["be2"], params["m2"], params["v2"])
    h = jnp.maximum(h @ params["w3"] + params["b3"], 0.0)
    h = bn(h, params["g3"], params["be3"], params["m3"], params["v3"])
    return h @ params["w4"] + params["b4"]


if __name__ == "__main__":
    key = jax.random.PRNGKey(0)
    B, input_dim, output_dim = 16, 32, 16

    kx, kp, kx2 = jax.random.split(key, 3)
    x = jax.random.normal(kx, (B, input_dim), jnp.float32)
    params = _init_params(kp, input_dim, output_dim)

    prepared, out_dim = prepare_params(params)   # one-time BN fold / pad / bf16 cast

    # Primary small-shape check.
    _, result = stm_regression_forward(x, prepared, out_dim)
    result = jax.block_until_ready(result)
    ref = _reference(x, params)
    assert result.shape == (B, output_dim)
    # bf16 weights/activations/output (f32 accumulation) -> loose tolerance vs f32 ref.
    assert jnp.allclose(result, ref, atol=5e-2, rtol=5e-2), (
        float(jnp.max(jnp.abs(result - ref))))

    # Ragged / multi-step path check (B % tb != 0, grid > 1): edge tile rows are
    # undefined on input but masked on writeback, so valid rows must still match.
    B2 = 200
    x2 = jax.random.normal(kx2, (B2, input_dim), jnp.float32)
    _, result2 = stm_regression_forward(x2, prepared, out_dim)
    result2 = jax.block_until_ready(result2)
    ref2 = _reference(x2, params)
    assert result2.shape == (B2, output_dim)
    assert jnp.allclose(result2, ref2, atol=5e-2, rtol=5e-2), (
        float(jnp.max(jnp.abs(result2 - ref2))))

    print("KERNEL_OK")
</pallas_src>

<mosaic_0001>
module attributes {stable_mosaic.version = 11 : i64} {
  func.func @_mlp_kernel(%arg0: i32, %arg1: memref<16x32xf32, #tpu.memory_space<vmem>>, %arg2: memref<32x128xbf16, #tpu.memory_space<vmem>>, %arg3: memref<1x128xf32, #tpu.memory_space<vmem>>, %arg4: memref<128x256xbf16, #tpu.memory_space<vmem>>, %arg5: memref<1x256xf32, #tpu.memory_space<vmem>>, %arg6: memref<256x512xbf16, #tpu.memory_space<vmem>>, %arg7: memref<1x512xf32, #tpu.memory_space<vmem>>, %arg8: memref<512x128xbf16, #tpu.memory_space<vmem>>, %arg9: memref<1x128xf32, #tpu.memory_space<vmem>>, %arg10: memref<16x128xbf16, #tpu.memory_space<vmem>>) attributes {dimension_semantics = [#tpu.dimension_semantics<parallel>], iteration_bounds = array<i64: 1>, scalar_prefetch = 0 : i64, scratch_operands = 0 : i64, tpu.core_type = #tpu.core_type<tc>, window_params = [{transform_indices = @transform_0, window_bounds = array<i64: 16, 32>}, {pipeline_mode = #tpu.pipeline_mode<synchronous>, transform_indices = @transform_1, window_bounds = array<i64: 32, 128>}, {pipeline_mode = #tpu.pipeline_mode<synchronous>, transform_indices = @transform_2, window_bounds = array<i64: 1, 128>}, {pipeline_mode = #tpu.pipeline_mode<synchronous>, transform_indices = @transform_3, window_bounds = array<i64: 128, 256>}, {pipeline_mode = #tpu.pipeline_mode<synchronous>, transform_indices = @transform_4, window_bounds = array<i64: 1, 256>}, {pipeline_mode = #tpu.pipeline_mode<synchronous>, transform_indices = @transform_5, window_bounds = array<i64: 256, 512>}, {pipeline_mode = #tpu.pipeline_mode<synchronous>, transform_indices = @transform_6, window_bounds = array<i64: 1, 512>}, {pipeline_mode = #tpu.pipeline_mode<synchronous>, transform_indices = @transform_7, window_bounds = array<i64: 512, 128>}, {pipeline_mode = #tpu.pipeline_mode<synchronous>, transform_indices = @transform_8, window_bounds = array<i64: 1, 128>}, {transform_indices = @transform_9, window_bounds = array<i64: 16, 128>}]} {
    %c0 = arith.constant 0 : index
    %c0_0 = arith.constant 0 : index
    %0 = vector.load %arg1[%c0, %c0_0] : memref<16x32xf32, #tpu.memory_space<vmem>>, vector<16x32xf32>
    %1 = arith.truncf %0 : vector<16x32xf32> to vector<16x32xbf16>
    %c0_1 = arith.constant 0 : index
    %c0_2 = arith.constant 0 : index
    %2 = vector.load %arg2[%c0_1, %c0_2] : memref<32x128xbf16, #tpu.memory_space<vmem>>, vector<32x128xbf16>
    %cst = arith.constant dense<0.000000e+00> : vector<16x128xf32>
    %3 = tpu.matmul %1, %2, %cst {dimension_numbers = #tpu.dot_dimension_numbers<[1], [0], [0], [1], [0, 0, 1, 1], [], []>} : vector<16x32xbf16>, vector<32x128xbf16>, vector<16x128xf32> -> vector<16x128xf32>
    %c0_3 = arith.constant 0 : index
    %c0_4 = arith.constant 0 : index
    %4 = vector.load %arg3[%c0_3, %c0_4] : memref<1x128xf32, #tpu.memory_space<vmem>>, vector<1x128xf32>
    %5 = vector.broadcast %4 : vector<1x128xf32> to vector<16x128xf32>
    %6 = arith.addf %3, %5 : vector<16x128xf32>
    %cst_5 = arith.constant 0.000000e+00 : f32
    %7 = vector.broadcast %cst_5 : f32 to vector<16x128xf32>
    %8 = arith.maximumf %6, %7 : vector<16x128xf32>
    %9 = arith.truncf %8 : vector<16x128xf32> to vector<16x128xbf16>
    %c0_6 = arith.constant 0 : index
    %c0_7 = arith.constant 0 : index
    %10 = vector.load %arg4[%c0_6, %c0_7] : memref<128x256xbf16, #tpu.memory_space<vmem>>, vector<128x256xbf16>
    %cst_8 = arith.constant dense<0.000000e+00> : vector<16x256xf32>
    %11 = tpu.matmul %9, %10, %cst_8 {dimension_numbers = #tpu.dot_dimension_numbers<[1], [0], [0], [1], [0, 0, 1, 1], [], []>} : vector<16x128xbf16>, vector<128x256xbf16>, vector<16x256xf32> -> vector<16x256xf32>
    %c0_9 = arith.constant 0 : index
    %c0_10 = arith.constant 0 : index
    %12 = vector.load %arg5[%c0_9, %c0_10] : memref<1x256xf32, #tpu.memory_space<vmem>>, vector<1x256xf32>
    %13 = vector.broadcast %12 : vector<1x256xf32> to vector<16x256xf32>
    %14 = arith.addf %11, %13 : vector<16x256xf32>
    %cst_11 = arith.constant 0.000000e+00 : f32
    %15 = vector.broadcast %cst_11 : f32 to vector<16x256xf32>
    %16 = arith.maximumf %14, %15 : vector<16x256xf32>
    %17 = arith.truncf %16 : vector<16x256xf32> to vector<16x256xbf16>
    %c0_12 = arith.constant 0 : index
    %c0_13 = arith.constant 0 : index
    %18 = vector.load %arg6[%c0_12, %c0_13] : memref<256x512xbf16, #tpu.memory_space<vmem>>, vector<256x512xbf16>
    %cst_14 = arith.constant dense<0.000000e+00> : vector<16x512xf32>
    %19 = tpu.matmul %17, %18, %cst_14 {dimension_numbers = #tpu.dot_dimension_numbers<[1], [0], [0], [1], [0, 0, 1, 1], [], []>} : vector<16x256xbf16>, vector<256x512xbf16>, vector<16x512xf32> -> vector<16x512xf32>
    %c0_15 = arith.constant 0 : index
    %c0_16 = arith.constant 0 : index
    %20 = vector.load %arg7[%c0_15, %c0_16] : memref<1x512xf32, #tpu.memory_space<vmem>>, vector<1x512xf32>
    %21 = vector.broadcast %20 : vector<1x512xf32> to vector<16x512xf32>
    %22 = arith.addf %19, %21 : vector<16x512xf32>
    %cst_17 = arith.constant 0.000000e+00 : f32
    %23 = vector.broadcast %cst_17 : f32 to vector<16x512xf32>
    %24 = arith.maximumf %22, %23 : vector<16x512xf32>
    %25 = arith.truncf %24 : vector<16x512xf32> to vector<16x512xbf16>
    %c0_18 = arith.constant 0 : index
    %c0_19 = arith.constant 0 : index
    %26 = vector.load %arg8[%c0_18, %c0_19] : memref<512x128xbf16, #tpu.memory_space<vmem>>, vector<512x128xbf16>
    %cst_20 = arith.constant dense<0.000000e+00> : vector<16x128xf32>
    %27 = tpu.matmul %25, %26, %cst_20 {dimension_numbers = #tpu.dot_dimension_numbers<[1], [0], [0], [1], [0, 0, 1, 1], [], []>} : vector<16x512xbf16>, vector<512x128xbf16>, vector<16x128xf32> -> vector<16x128xf32>
    %c0_21 = arith.constant 0 : index
    %c0_22 = arith.constant 0 : index
    %28 = vector.load %arg9[%c0_21, %c0_22] : memref<1x128xf32, #tpu.memory_space<vmem>>, vector<1x128xf32>
    %29 = vector.broadcast %28 : vector<1x128xf32> to vector<16x128xf32>
    %30 = arith.addf %27, %29 : vector<16x128xf32>
    %31 = arith.truncf %30 : vector<16x128xf32> to vector<16x128xbf16>
    %c0_23 = arith.constant 0 : index
    %c0_24 = arith.constant 0 : index
    %32 = vector.load %arg10[%c0_23, %c0_24] : memref<16x128xbf16, #tpu.memory_space<vmem>>, vector<16x128xbf16>
    tpu.vector_store %arg10[%c0_23, %c0_24], %31 {strides = array<i32>} : memref<16x128xbf16, #tpu.memory_space<vmem>>, vector<16x128xbf16>,
    return
  }
  func.func @transform_0(%arg0: i32) -> (i32, i32) {
    %c0_i32 = arith.constant 0 : i32
    %c0_i32_0 = arith.constant 0 : i32
    return %arg0, %c0_i32 : i32, i32
  }
  func.func @transform_1(%arg0: i32) -> (i32, i32) {
    %c0_i32 = arith.constant 0 : i32
    %c0_i32_0 = arith.constant 0 : i32
    %c0_i32_1 = arith.constant 0 : i32
    return %c0_i32, %c0_i32_0 : i32, i32
  }
  func.func @transform_2(%arg0: i32) -> (i32, i32) {
    %c0_i32 = arith.constant 0 : i32
    %c0_i32_0 = arith.constant 0 : i32
    %c0_i32_1 = arith.constant 0 : i32
    return %c0_i32, %c0_i32_0 : i32, i32
  }
  func.func @transform_3(%arg0: i32) -> (i32, i32) {
    %c0_i32 = arith.constant 0 : i32
    %c0_i32_0 = arith.constant 0 : i32
    %c0_i32_1 = arith.constant 0 : i32
    return %c0_i32, %c0_i32_0 : i32, i32
  }
  func.func @transform_4(%arg0: i32) -> (i32, i32) {
    %c0_i32 = arith.constant 0 : i32
    %c0_i32_0 = arith.constant 0 : i32
    %c0_i32_1 = arith.constant 0 : i32
    return %c0_i32, %c0_i32_0 : i32, i32
  }
  func.func @transform_5(%arg0: i32) -> (i32, i32) {
    %c0_i32 = arith.constant 0 : i32
    %c0_i32_0 = arith.constant 0 : i32
    %c0_i32_1 = arith.constant 0 : i32
    return %c0_i32, %c0_i32_0 : i32, i32
  }
  func.func @transform_6(%arg0: i32) -> (i32, i32) {
    %c0_i32 = arith.constant 0 : i32
    %c0_i32_0 = arith.constant 0 : i32
    %c0_i32_1 = arith.constant 0 : i32
    return %c0_i32, %c0_i32_0 : i32, i32
  }
  func.func @transform_7(%arg0: i32) -> (i32, i32) {
    %c0_i32 = arith.constant 0 : i32
    %c0_i32_0 = arith.constant 0 : i32
    %c0_i32_1 = arith.constant 0 : i32
    return %c0_i32, %c0_i32_0 : i32, i32
  }
  func.func @transform_8(%arg0: i32) -> (i32, i32) {
    %c0_i32 = arith.constant 0 : i32
    %c0_i32_0 = arith.constant 0 : i32
    %c0_i32_1 = arith.constant 0 : i32
    return %c0_i32, %c0_i32_0 : i32, i32
  }
  func.func @transform_9(%arg0: i32) -> (i32, i32) {
    %c0_i32 = arith.constant 0 : i32
    %c0_i32_0 = arith.constant 0 : i32
    return %arg0, %c0_i32 : i32, i32
  }
}

</mosaic_0001>

<llo_original>
// kernel: tpu_custom_call.1
$region0: #{tpu_custom_call.1}
  #allocation0 [shape = 'u32[]', space=smem, size = 0x4, offset = 0x4, fixed_abs, tag = 'smem constant byte address 0x4 - core index']
  #allocation1 [shape = 'u32[144,128]{1,0:T(1,128)}', space=vmem, size = 0x12000, scoped, tag = 'internal scratch']
  %s0 = inlined_call_operand.hbm [shape: f32[16,32], index: 0, kind: input, shape index: {}]
  %s1 = inlined_call_operand.hbm [shape: bf16[32,128], index: 1, kind: input, shape index: {}]
  %s2 = inlined_call_operand.vmem [shape: f32[1,128], index: 2, kind: input, shape index: {}]
  %s3 = inlined_call_operand.hbm [shape: bf16[128,256], index: 3, kind: input, shape index: {}]
  %s4 = inlined_call_operand.vmem [shape: f32[1,256], index: 4, kind: input, shape index: {}]
  %s5 = inlined_call_operand.hbm [shape: bf16[256,512], index: 5, kind: input, shape index: {}]
  %s6 = inlined_call_operand.vmem [shape: f32[1,512], index: 6, kind: input, shape index: {}]
  %s7 = inlined_call_operand.hbm [shape: bf16[512,128], index: 7, kind: input, shape index: {}]
  %s8 = inlined_call_operand.vmem [shape: f32[1,128], index: 8, kind: input, shape index: {}]
  %s9 = inlined_call_operand.hbm [shape: bf16[16,128], index: 9, kind: output, shape index: {}]
  %s10 = sld [smem:[#allocation0]]
  $region66: #{tpu_custom_call.1} parent=0
    _
  %s12 = ssub.s32 1, %s10
  %s13 = scalar_select 0, %s12, %s10
  $region1: #{tpu_custom_call.1} parent=0
    #allocation2 [shape = 'u8[8192]{0}', space=vmem, size = 0x2000, scoped, tag = 'input window, operand 0, single buffered']
    #allocation3 [shape = 's32[1]{0}', space=sflag, size = 0x4, scoped, tag = 'scoped memory for tpu_custom_call.1']
    #allocation4 [shape = 's32[1]{0}', space=sflag, size = 0x4, scoped, tag = 'scoped memory for tpu_custom_call.1']
    #allocation5 [shape = 'u8[8192]{0}', space=vmem, size = 0x2000, scoped, tag = 'input window, operand 1, single buffered']
    #allocation6 [shape = 's32[1]{0}', space=sflag, size = 0x4, scoped, tag = 'scoped memory for tpu_custom_call.1']
    #allocation7 [shape = 'u8[65536]{0}', space=vmem, size = 0x10000, scoped, tag = 'input window, operand 3, single buffered']
    #allocation8 [shape = 'u8[262144]{0}', space=vmem, size = 0x40000, scoped, tag = 'input window, operand 5, single buffered']
    #allocation9 [shape = 's32[1]{0}', space=sflag, size = 0x4, scoped, tag = 'scoped memory for tpu_custom_call.1']
    #allocation10 [shape = 'u8[131072]{0}', space=vmem, size = 0x20000, scoped, tag = 'input window, operand 7, single buffered']
    #allocation11 [shape = 'u8[4096]{0}', space=vmem, size = 0x1000, scoped, tag = 'output window, operand 0, single buffered']
    %14 = vsyncpa [#allocation3], 0
    %15 = vsyncpa [#allocation6], 0
    %16 = vsyncpa [#allocation9], 0
    %17 = vsyncpa [#allocation4], 0
    // Predicated region
    $region2: #{tpu_custom_call.1} parent=1 // pred_check
      _
    $region3: #{tpu_custom_call.1} parent=1 // pred_check_branch
      %19 = sbr.rel (0) target = $region5
    $region4: #{tpu_custom_call.1} parent=1 // pred_region
      %s21 = ssub.s32 256, 256
      %22 = vsyncadd [#allocation3], %s21
      %s23 = sshll.u32 [#allocation2], 4
      %s24 = int_to_ptr.vmem [resolvable:$true] %s23
      %29 = dma.hbm_to_vmem [thread:$0]  %s0, 256, %s24, [#allocation3], 128, 128, 8
    $region5: #{tpu_custom_call.1} parent=1 // pred_fallthru
      _
    // Predicated region
    $region6: #{tpu_custom_call.1} parent=1 // pred_check
      _
    $region7: #{tpu_custom_call.1} parent=1 // pred_check_branch
      %31 = sbr.rel (0) target = $region9
    $region8: #{tpu_custom_call.1} parent=1 // pred_region
      %s33 = ssub.s32 256, 256
      %34 = vsyncadd [#allocation6], %s33
      %s35 = sshll.u32 [#allocation5], 4
      %s36 = int_to_ptr.vmem [resolvable:$true] %s35
      %41 = dma.hbm_to_vmem [thread:$0]  %s1, 256, %s36, [#allocation6], 64, 64, 4
    $region9: #{tpu_custom_call.1} parent=1 // pred_fallthru
      _
    // Predicated region
    $region10: #{tpu_custom_call.1} parent=1 // pred_check
      _
    $region11: #{tpu_custom_call.1} parent=1 // pred_check_branch
      %43 = sbr.rel (0) target = $region13
    $region12: #{tpu_custom_call.1} parent=1 // pred_region
      _
    $region13: #{tpu_custom_call.1} parent=1 // pred_fallthru
      _
    // Predicated region
    $region14: #{tpu_custom_call.1} parent=1 // pred_check
      _
    $region15: #{tpu_custom_call.1} parent=1 // pred_check_branch
      %45 = sbr.rel (0) target = $region17
    $region16: #{tpu_custom_call.1} parent=1 // pred_region
      %s47 = ssub.s32 2048, 2048
      %48 = vsyncadd [#allocation6], %s47
      %s49 = sshll.u32 [#allocation7], 4
      %s50 = int_to_ptr.vmem [resolvable:$true] %s49
      %55 = dma.hbm_to_vmem [thread:$0]  %s3, 2048, %s50, [#allocation6], 128, 128, 8
    $region17: #{tpu_custom_call.1} parent=1 // pred_fallthru
      _
    // Predicated region
    $region18: #{tpu_custom_call.1} parent=1 // pred_check
      _
    $region19: #{tpu_custom_call.1} parent=1 // pred_check_branch
      %57 = sbr.rel (0) target = $region21
    $region20: #{tpu_custom_call.1} parent=1 // pred_region
      _
    $region21: #{tpu_custom_call.1} parent=1 // pred_fallthru
      _
    // Predicated region
    $region22: #{tpu_custom_call.1} parent=1 // pred_check
      _
    $region23: #{tpu_custom_call.1} parent=1 // pred_check_branch
      %59 = sbr.rel (0) target = $region25
    $region24: #{tpu_custom_call.1} parent=1 // pred_region
      %s61 = ssub.s32 8192, 8192
      %62 = vsyncadd [#allocation9], %s61
      %s63 = sshll.u32 [#allocation8], 4
      %s64 = int_to_ptr.vmem [resolvable:$true] %s63
      %69 = dma.hbm_to_vmem [thread:$0]  %s5, 8192, %s64, [#allocation9], 256, 256, 16
    $region25: #{tpu_custom_call.1} parent=1 // pred_fallthru
      _
    // Predicated region
    $region26: #{tpu_custom_call.1} parent=1 // pred_check
      _
    $region27: #{tpu_custom_call.1} parent=1 // pred_check_branch
      %71 = sbr.rel (0) target = $region29
    $region28: #{tpu_custom_call.1} parent=1 // pred_region
      _
    $region29: #{tpu_custom_call.1} parent=1 // pred_fallthru
      _
    // Predicated region
    $region30: #{tpu_custom_call.1} parent=1 // pred_check
      _
    $region31: #{tpu_custom_call.1} parent=1 // pred_check_branch
      %73 = sbr.rel (0) target = $region33
    $region32: #{tpu_custom_call.1} parent=1 // pred_region
      %s75 = ssub.s32 4096, 4096
      %76 = vsyncadd [#allocation9], %s75
      %s77 = sshll.u32 [#allocation10], 4
      %s78 = int_to_ptr.vmem [resolvable:$true] %s77
      %83 = dma.hbm_to_vmem [thread:$0]  %s7, 4096, %s78, [#allocation9], 64, 64, 4
    $region33: #{tpu_custom_call.1} parent=1 // pred_fallthru
      _
    // Predicated region
    $region34: #{tpu_custom_call.1} parent=1 // pred_check
      _
    $region35: #{tpu_custom_call.1} parent=1 // pred_check_branch
      %85 = sbr.rel (0) target = $region37
    $region36: #{tpu_custom_call.1} parent=1 // pred_region
      _
    $region37: #{tpu_custom_call.1} parent=1 // pred_fallthru
      _
    // Predicated region
    $region38: #{tpu_custom_call.1} parent=1 // pred_check
      _
    $region39: #{tpu_custom_call.1} parent=1 // pred_check_branch
      %87 = sbr.rel (0) target = $region41
    $region40: #{tpu_custom_call.1} parent=1 // pred_region
      %88 = dma.done [#allocation3], 256
    $region41: #{tpu_custom_call.1} parent=1 // pred_fallthru
      _
    // Predicated region
    $region42: #{tpu_custom_call.1} parent=1 // pred_check
      _
    $region43: #{tpu_custom_call.1} parent=1 // pred_check_branch
      %90 = sbr.rel (0) target = $region45
    $region44: #{tpu_custom_call.1} parent=1 // pred_region
      %91 = dma.done [#allocation6], 256
    $region45: #{tpu_custom_call.1} parent=1 // pred_fallthru
      _
    // Predicated region
    $region46: #{tpu_custom_call.1} parent=1 // pred_check
      _
    $region47: #{tpu_custom_call.1} parent=1 // pred_check_branch
      %93 = sbr.rel (0) target = $region49
    $region48: #{tpu_custom_call.1} parent=1 // pred_region
      %94 = dma.done [#allocation6], 2048
    $region49: #{tpu_custom_call.1} parent=1 // pred_fallthru
      _
    // Predicated region
    $region50: #{tpu_custom_call.1} parent=1 // pred_check
      _
    $region51: #{tpu_custom_call.1} parent=1 // pred_check_branch
      %96 = sbr.rel (0) target = $region53
    $region52: #{tpu_custom_call.1} parent=1 // pred_region
      %97 = dma.done [#allocation9], 8192
    $region53: #{tpu_custom_call.1} parent=1 // pred_fallthru
      _
    // Predicated region
    $region54: #{tpu_custom_call.1} parent=1 // pred_check
      _
    $region55: #{tpu_custom_call.1} parent=1 // pred_check_branch
      %99 = sbr.rel (0) target = $region57
    $region56: #{tpu_custom_call.1} parent=1 // pred_region
      %100 = dma.done [#allocation9], 4096
    $region57: #{tpu_custom_call.1} parent=1 // pred_fallthru
      _
    %v102 = vld [vmem:[#allocation2] sm:$0xff]
    %v103 = vld [vmem:[#allocation2 + $0x8] sm:$0xff]
    %v104 = vpack.c.bf16 %v103, %v102
    %v105 = vld [vmem:[#allocation5] sm:$0xf]
    %v106 = vld [vmem:[#allocation5 + $0x4] sm:$0xf]
    %v107 = vld [vmem:[#allocation5 + $0x8] sm:$0xf]
    %v108 = vld [vmem:[#allocation5 + $0xc] sm:$0xf]
    %v109 = vld [vmem:[%s2] sm:$0x1]
    %v111 = vlaneseq
    %v112 = vshrl.u32 %v111, 7
    %v113 = vsub.s32 0, %v112
    %v114 = vrot.slane %v109, %v113
    %v120 = vunpack.c.l.b16 %v105
    %v121 = vunpack.c.l.b16 %v106
    %v122 = vunpack.c.l.b16 %v107
    %v123 = vunpack.c.l.b16 %v108
    %v124 = vpack.c.b16 %v121, %v120
    %v125 = vpack.c.b16 %v123, %v122
    %vm128 = vcmask 261120
    %v130 = vsel %vm128, %v104, 0
    %132 = vmatprep.subr.bf16.mxu0 0
    %133 = vmatpush1.bf16.msra.mxu0 0
    %134 = vmatprep.subr.bf16.mxu0 0
    %135 = vmatpush1.bf16.msra.mxu0 0
    %136 = vmatprep.subr.bf16.mxu0 0
    %137 = vmatpush1.bf16.msra.mxu0 0
    %138 = vmatprep.subr.bf16.mxu0 0
    %139 = vmatpush1.bf16.msra.mxu0 0
    %140 = vmatprep.subr.bf16.mxu0 0
    %141 = vmatpush1.bf16.msra.mxu0 0
    %142 = vmatprep.subr.bf16.mxu0 0
    %143 = vmatpush1.bf16.msra.mxu0 0
    %144 = vmatprep.subr.bf16.mxu0 0
    %145 = vmatpush1.bf16.msra.mxu0 %v125
    %146 = vmatprep.subr.bf16.mxu0 0
    %147 = vmatpush1.bf16.msra.mxu0 %v124
    %148 = vmatprep.subr.bf16.mxu0 0
    %149 = vmatpush2.bf16.msra.mxu0 0
    %150 = vmatprep.subr.bf16.mxu0 0
    %151 = vmatpush2.bf16.msra.mxu0 0
    %152 = vmatprep.subr.bf16.mxu0 0
    %153 = vmatpush2.bf16.msra.mxu0 0
    %154 = vmatprep.subr.bf16.mxu0 0
    %155 = vmatpush2.bf16.msra.mxu0 0
    %156 = vmatprep.subr.bf16.mxu0 0
    %157 = vmatpush2.bf16.msra.mxu0 0
    %158 = vmatprep.subr.bf16.mxu0 0
    %159 = vmatpush2.bf16.msra.mxu0 0
    %160 = vmatprep.subr.bf16.mxu0 0
    %161 = vmatpush2.bf16.msra.mxu0 0
    %162 = vmatprep.subr.bf16.mxu0 0
    %163 = vmatpush2.bf16.msra.mxu0 0
    %164 = vmatprep.mubr.bf16.mxu0 0
    %165 = vmatmul.mubr.bf16.gmra.mxu0 %v130
    %v166 = vpop.f32.mrf.mxu0
    %v167 = vadd.f32 %v114, %v166
    %v168 = vpop.f32.mrf.mxu0
    %v169 = vpop.f32.mrf.mxu0
    %v170 = vadd.f32 %v114, %v169
    %v171 = vpop.f32.mrf.mxu0
    %172 = vdwg.mxu0
    %v173 = vmax.f32 %v167, 0.0
    %v174 = vmax.f32 %v170, 0.0
    %v175 = vpack.c.bf16 %v174, %v173
    %v176 = vld [vmem:[#allocation7] sm:$0xff]
    %v177 = vld [vmem:[#allocation7 + $0x8] sm:$0xff]
    %v178 = vld [vmem:[#allocation7 + $0x10] sm:$0xff]
    %v179 = vld [vmem:[#allocation7 + $0x18] sm:$0xff]
    %v180 = vld [vmem:[#allocation7 + $0x20] sm:$0xff]
    %v181 = vld [vmem:[#allocation7 + $0x28] sm:$0xff]
    %v182 = vld [vmem:[#allocation7 + $0x30] sm:$0xff]
    %v183 = vld [vmem:[#allocation7 + $0x38] sm:$0xff]
    %v184 = vld [vmem:[#allocation7 + $0x40] sm:$0xff]
    %v185 = vld [vmem:[#allocation7 + $0x48] sm:$0xff]
    %v186 = vld [vmem:[#allocation7 + $0x50] sm:$0xff]
    %v187 = vld [vmem:[#allocation7 + $0x58] sm:$0xff]
    %v188 = vld [vmem:[#allocation7 + $0x60] sm:$0xff]
    %v189 = vld [vmem:[#allocation7 + $0x68] sm:$0xff]
    %v190 = vld [vmem:[#allocation7 + $0x70] sm:$0xff]
    %v191 = vld [vmem:[#allocation7 + $0x78] sm:$0xff]
    %v192 = vld [vmem:[%s4] sm:$0x3]
    %v194 = vlaneseq
    %v195 = vshrl.u32 %v194, 7
    %v196 = vsub.s32 0, %v195
    %v197 = vrot.slane %v192, %v196
    %v198 = vlaneseq
    %v199 = vshrl.u32 %v198, 7
    %v200 = vsub.s32 1, %v199
    %v201 = vrot.slane %v192, %v200
    %v220 = vunpack.c.l.b16 %v176
    %v221 = vunpack.c.h.b16 %v176
    %v222 = vunpack.c.l.b16 %v177
    %v223 = vunpack.c.h.b16 %v177
    %v224 = vunpack.c.l.b16 %v178
    %v225 = vunpack.c.h.b16 %v178
    %v226 = vunpack.c.l.b16 %v179
    %v227 = vunpack.c.h.b16 %v179
    %v228 = vunpack.c.l.b16 %v180
    %v229 = vunpack.c.h.b16 %v180
    %v230 = vunpack.c.l.b16 %v181
    %v231 = vunpack.c.h.b16 %v181
    %v232 = vunpack.c.l.b16 %v182
    %v233 = vunpack.c.h.b16 %v182
    %v234 = vunpack.c.l.b16 %v183
    %v235 = vunpack.c.h.b16 %v183
    %v236 = vunpack.c.l.b16 %v184
    %v237 = vunpack.c.h.b16 %v184
    %v238 = vunpack.c.l.b16 %v185
    %v239 = vunpack.c.h.b16 %v185
    %v240 = vunpack.c.l.b16 %v186
    %v241 = vunpack.c.h.b16 %v186
    %v242 = vunpack.c.l.b16 %v187
    %v243 = vunpack.c.h.b16 %v187
    %v244 = vunpack.c.l.b16 %v188
    %v245 = vunpack.c.h.b16 %v188
    %v246 = vunpack.c.l.b16 %v189
    %v247 = vunpack.c.h.b16 %v189
    %v248 = vunpack.c.l.b16 %v190
    %v249 = vunpack.c.h.b16 %v190
    %v250 = vunpack.c.l.b16 %v191
    %v251 = vunpack.c.h.b16 %v191
    %v252 = vpack.c.b16 %v222, %v220
    %v253 = vpack.c.b16 %v223, %v221
    %v254 = vpack.c.b16 %v226, %v224
    %v255 = vpack.c.b16 %v227, %v225
    %v256 = vpack.c.b16 %v230, %v228
    %v257 = vpack.c.b16 %v231, %v229
    %v258 = vpack.c.b16 %v234, %v232
    %v259 = vpack.c.b16 %v235, %v233
    %v260 = vpack.c.b16 %v238, %v236
    %v261 = vpack.c.b16 %v239, %v237
    %v262 = vpack.c.b16 %v242, %v240
    %v263 = vpack.c.b16 %v243, %v241
    %v264 = vpack.c.b16 %v246, %v244
    %v265 = vpack.c.b16 %v247, %v245
    %v266 = vpack.c.b16 %v250, %v248
    %v267 = vpack.c.b16 %v251, %v249
    %284 = vmatprep.subr.bf16.mxu0 %v267
    %285 = vmatpush1.bf16.msra.mxu0 %v266
    %286 = vmatprep.subr.bf16.mxu0 %v265
    %287 = vmatpush1.bf16.msra.mxu0 %v264
    %288 = vmatprep.subr.bf16.mxu0 %v263
    %289 = vmatpush1.bf16.msra.mxu0 %v262
    %290 = vmatprep.subr.bf16.mxu0 %v261
    %291 = vmatpush1.bf16.msra.mxu0 %v260
    %292 = vmatprep.subr.bf16.mxu0 %v259
    %293 = vmatpush1.bf16.msra.mxu0 %v258
    %294 = vmatprep.subr.bf16.mxu0 %v257
    %295 = vmatpush1.bf16.msra.mxu0 %v256
    %296 = vmatprep.subr.bf16.mxu0 %v255
    %297 = vmatpush1.bf16.msra.mxu0 %v254
    %298 = vmatprep.subr.bf16.mxu0 %v253
    %299 = vmatpush1.bf16.msra.mxu0 %v252
    %300 = vmatprep.subr.bf16.mxu0 0
    %301 = vmatpush2.bf16.msra.mxu0 0
    %302 = vmatprep.subr.bf16.mxu0 0
    %303 = vmatpush2.bf16.msra.mxu0 0
    %304 = vmatprep.subr.bf16.mxu0 0
    %305 = vmatpush2.bf16.msra.mxu0 0
    %306 = vmatprep.subr.bf16.mxu0 0
    %307 = vmatpush2.bf16.msra.mxu0 0
    %308 = vmatprep.subr.bf16.mxu0 0
    %309 = vmatpush2.bf16.msra.mxu0 0
    %310 = vmatprep.subr.bf16.mxu0 0
    %311 = vmatpush2.bf16.msra.mxu0 0
    %312 = vmatprep.subr.bf16.mxu0 0
    %313 = vmatpush2.bf16.msra.mxu0 0
    %314 = vmatprep.subr.bf16.mxu0 0
    %315 = vmatpush2.bf16.msra.mxu0 0
    %316 = vmatprep.mubr.bf16.mxu0 0
    %317 = vmatmul.mubr.bf16.gmra.mxu0 %v175
    %v318 = vpop.f32.mrf.mxu0
    %v319 = vadd.f32 %v197, %v318
    %v320 = vpop.f32.mrf.mxu0
    %v321 = vadd.f32 %v201, %v320
    %v322 = vpop.f32.mrf.mxu0
    %v323 = vadd.f32 %v197, %v322
    %v324 = vpop.f32.mrf.mxu0
    %v325 = vadd.f32 %v201, %v324
    %326 = vdwg.mxu0
    %v327 = vmax.f32 %v319, 0.0
    %v328 = vmax.f32 %v321, 0.0
    %v329 = vmax.f32 %v323, 0.0
    %v330 = vmax.f32 %v325, 0.0
    %v331 = vpack.c.bf16 %v329, %v327
    %v332 = vpack.c.bf16 %v330, %v328
    %v333 = vld [vmem:[#allocation8] sm:$0xff]
    %v334 = vld [vmem:[#allocation8 + $0x8] sm:$0xff]
    %v335 = vld [vmem:[#allocation8 + $0x10] sm:$0xff]
    %v336 = vld [vmem:[#allocation8 + $0x18] sm:$0xff]
    %v337 = vld [vmem:[#allocation8 + $0x20] sm:$0xff]
    %v338 = vld [vmem:[#allocation8 + $0x28] sm:$0xff]
    %v339 = vld [vmem:[#allocation8 + $0x30] sm:$0xff]
    %v340 = vld [vmem:[#allocation8 + $0x38] sm:$0xff]
    %v341 = vld [vmem:[#allocation8 + $0x40] sm:$0xff]
    %v342 = vld [vmem:[#allocation8 + $0x48] sm:$0xff]
    %v343 = vld [vmem:[#allocation8 + $0x50] sm:$0xff]
    %v344 = vld [vmem:[#allocation8 + $0x58] sm:$0xff]
    %v345 = vld [vmem:[#allocation8 + $0x60] sm:$0xff]
    %v346 = vld [vmem:[#allocation8 + $0x68] sm:$0xff]
    %v347 = vld [vmem:[#allocation8 + $0x70] sm:$0xff]
    %v348 = vld [vmem:[#allocation8 + $0x78] sm:$0xff]
    %v349 = vld [vmem:[#allocation8 + $0x80] sm:$0xff]
    %v350 = vld [vmem:[#allocation8 + $0x88] sm:$0xff]
    %v351 = vld [vmem:[#allocation8 + $0x90] sm:$0xff]
    %v352 = vld [vmem:[#allocation8 + $0x98] sm:$0xff]
    %v353 = vld [vmem:[#allocation8 + $0xa0] sm:$0xff]
    %v354 = vld [vmem:[#allocation8 + $0xa8] sm:$0xff]
    %v355 = vld [vmem:[#allocation8 + $0xb0] sm:$0xff]
    %v356 = vld [vmem:[#allocation8 + $0xb8] sm:$0xff]
    %v357 = vld [vmem:[#allocation8 + $0xc0] sm:$0xff]
    %v358 = vld [vmem:[#allocation8 + $0xc8] sm:$0xff]
    %v359 = vld [vmem:[#allocation8 + $0xd0] sm:$0xff]
    %v360 = vld [vmem:[#allocation8 + $0xd8] sm:$0xff]
    %v361 = vld [vmem:[#allocation8 + $0xe0] sm:$0xff]
    %v362 = vld [vmem:[#allocation8 + $0xe8] sm:$0xff]
    %v363 = vld [vmem:[#allocation8 + $0xf0] sm:$0xff]
    %v364 = vld [vmem:[#allocation8 + $0xf8] sm:$0xff]
    %v365 = vld [vmem:[#allocation8 + $0x100] sm:$0xff]
    %v366 = vld [vmem:[#allocation8 + $0x108] sm:$0xff]
    %v367 = vld [vmem:[#allocation8 + $0x110] sm:$0xff]
    %v368 = vld [vmem:[#allocation8 + $0x118] sm:$0xff]
    %v369 = vld [vmem:[#allocation8 + $0x120] sm:$0xff]
    %v370 = vld [vmem:[#allocation8 + $0x128] sm:$0xff]
    %v371 = vld [vmem:[#allocation8 + $0x130] sm:$0xff]
    %v372 = vld [vmem:[#allocation8 + $0x138] sm:$0xff]
    %v373 = vld [vmem:[#allocation8 + $0x140] sm:$0xff]
    %v374 = vld [vmem:[#allocation8 + $0x148] sm:$0xff]
    %v375 = vld [vmem:[#allocation8 + $0x150] sm:$0xff]
    %v376 = vld [vmem:[#allocation8 + $0x158] sm:$0xff]
    %v377 = vld [vmem:[#allocation8 + $0x160] sm:$0xff]
    %v378 = vld [vmem:[#allocation8 + $0x168] sm:$0xff]
    %v379 = vld [vmem:[#allocation8 + $0x170] sm:$0xff]
    %v380 = vld [vmem:[#allocation8 + $0x178] sm:$0xff]
    %v381 = vld [vmem:[#allocation8 + $0x180] sm:$0xff]
    %v382 = vld [vmem:[#allocation8 + $0x188] sm:$0xff]
    %v383 = vld [vmem:[#allocation8 + $0x190] sm:$0xff]
    %v384 = vld [vmem:[#allocation8 + $0x198] sm:$0xff]
    %v385 = vld [vmem:[#allocation8 + $0x1a0] sm:$0xff]
    %v386 = vld [vmem:[#allocation8 + $0x1a8] sm:$0xff]
    %v387 = vld [vmem:[#allocation8 + $0x1b0] sm:$0xff]
    %v388 = vld [vmem:[#allocation8 + $0x1b8] sm:$0xff]
    %v389 = vld [vmem:[#allocation8 + $0x1c0] sm:$0xff]
    %v390 = vld [vmem:[#allocation8 + $0x1c8] sm:$0xff]
    %v391 = vld [vmem:[#allocation8 + $0x1d0] sm:$0xff]
    %v392 = vld [vmem:[#allocation8 + $0x1d8] sm:$0xff]
    %v393 = vld [vmem:[#allocation8 + $0x1e0] sm:$0xff]
    %v394 = vld [vmem:[#allocation8 + $0x1e8] sm:$0xff]
    %v395 = vld [vmem:[#allocation8 + $0x1f0] sm:$0xff]
    %v396 = vld [vmem:[#allocation8 + $0x1f8] sm:$0xff]
    %v397 = vld [vmem:[%s6] sm:$0xf]
    %v399 = vlaneseq
    %v400 = vshrl.u32 %v399, 7
    %v401 = vsub.s32 0, %v400
    %v402 = vrot.slane %v397, %v401
    %v403 = vlaneseq
    %v404 = vshrl.u32 %v403, 7
    %v405 = vsub.s32 1, %v404
    %v406 = vrot.slane %v397, %v405
    %v407 = vlaneseq
    %v408 = vshrl.u32 %v407, 7
    %v409 = vsub.s32 2, %v408
    %v410 = vrot.slane %v397, %v409
    %v411 = vlaneseq
    %v412 = vshrl.u32 %v411, 7
    %v413 = vsub.s32 3, %v412
    %v414 = vrot.slane %v397, %v413
    %v483 = vunpack.c.l.b16 %v333
    %v484 = vunpack.c.h.b16 %v333
    %v485 = vunpack.c.l.b16 %v334
    %v486 = vunpack.c.h.b16 %v334
    %v487 = vunpack.c.l.b16 %v335
    %v488 = vunpack.c.h.b16 %v335
    %v489 = vunpack.c.l.b16 %v336
    %v490 = vunpack.c.h.b16 %v336
    %v491 = vunpack.c.l.b16 %v337
    %v492 = vunpack.c.h.b16 %v337
    %v493 = vunpack.c.l.b16 %v338
    %v494 = vunpack.c.h.b16 %v338
    %v495 = vunpack.c.l.b16 %v339
    %v496 = vunpack.c.h.b16 %v339
    %v497 = vunpack.c.l.b16 %v340
    %v498 = vunpack.c.h.b16 %v340
    %v499 = vunpack.c.l.b16 %v341
    %v500 = vunpack.c.h.b16 %v341
    %v501 = vunpack.c.l.b16 %v342
    %v502 = vunpack.c.h.b16 %v342
    %v503 = vunpack.c.l.b16 %v343
    %v504 = vunpack.c.h.b16 %v343
    %v505 = vunpack.c.l.b16 %v344
    %v506 = vunpack.c.h.b16 %v344
    %v507 = vunpack.c.l.b16 %v345
    %v508 = vunpack.c.h.b16 %v345
    %v509 = vunpack.c.l.b16 %v346
    %v510 = vunpack.c.h.b16 %v346
    %v511 = vunpack.c.l.b16 %v347
    %v512 = vunpack.c.h.b16 %v347
    %v513 = vunpack.c.l.b16 %v348
    %v514 = vunpack.c.h.b16 %v348
    %v515 = vunpack.c.l.b16 %v349
    %v516 = vunpack.c.h.b16 %v349
    %v517 = vunpack.c.l.b16 %v350
    %v518 = vunpack.c.h.b16 %v350
    %v519 = vunpack.c.l.b16 %v351
    %v520 = vunpack.c.h.b16 %v351
    %v521 = vunpack.c.l.b16 %v352
    %v522 = vunpack.c.h.b16 %v352
    %v523 = vunpack.c.l.b16 %v353
    %v524 = vunpack.c.h.b16 %v353
    %v525 = vunpack.c.l.b16 %v354
    %v526 = vunpack.c.h.b16 %v354
    %v527 = vunpack.c.l.b16 %v355
    %v528 = vunpack.c.h.b16 %v355
    %v529 = vunpack.c.l.b16 %v356
    %v530 = vunpack.c.h.b16 %v356
    %v531 = vunpack.c.l.b16 %v357
    %v532 = vunpack.c.h.b16 %v357
    %v533 = vunpack.c.l.b16 %v358
    %v534 = vunpack.c.h.b16 %v358
    %v535 = vunpack.c.l.b16 %v359
    %v536 = vunpack.c.h.b16 %v359
    %v537 = vunpack.c.l.b16 %v360
    %v538 = vunpack.c.h.b16 %v360
    %v539 = vunpack.c.l.b16 %v361
    %v540 = vunpack.c.h.b16 %v361
    %v541 = vunpack.c.l.b16 %v362
    %v542 = vunpack.c.h.b16 %v362
    %v543 = vunpack.c.l.b16 %v363
    %v544 = vunpack.c.h.b16 %v363
    %v545 = vunpack.c.l.b16 %v364
    %v546 = vunpack.c.h.b16 %v364
    %v547 = vunpack.c.l.b16 %v365
    %v548 = vunpack.c.h.b16 %v365
    %v549 = vunpack.c.l.b16 %v366
    %v550 = vunpack.c.h.b16 %v366
    %v551 = vunpack.c.l.b16 %v367
    %v552 = vunpack.c.h.b16 %v367
    %v553 = vunpack.c.l.b16 %v368
    %v554 = vunpack.c.h.b16 %v368
    %v555 = vunpack.c.l.b16 %v369
    %v556 = vunpack.c.h.b16 %v369
    %v557 = vunpack.c.l.b16 %v370
    %v558 = vunpack.c.h.b16 %v370
    %v559 = vunpack.c.l.b16 %v371
    %v560 = vunpack.c.h.b16 %v371
    %v561 = vunpack.c.l.b16 %v372
    %v562 = vunpack.c.h.b16 %v372
    %v563 = vunpack.c.l.b16 %v373
    %v564 = vunpack.c.h.b16 %v373
    %v565 = vunpack.c.l.b16 %v374
    %v566 = vunpack.c.h.b16 %v374
    %v567 = vunpack.c.l.b16 %v375
    %v568 = vunpack.c.h.b16 %v375
    %v569 = vunpack.c.l.b16 %v376
    %v570 = vunpack.c.h.b16 %v376
    %v571 = vunpack.c.l.b16 %v377
    %v572 = vunpack.c.h.b16 %v377
    %v573 = vunpack.c.l.b16 %v378
    %v574 = vunpack.c.h.b16 %v378
    %v575 = vunpack.c.l.b16 %v379
    %v576 = vunpack.c.h.b16 %v379
    %v577 = vunpack.c.l.b16 %v380
    %v578 = vunpack.c.h.b16 %v380
    %v579 = vunpack.c.l.b16 %v381
    %v580 = vunpack.c.h.b16 %v381
    %v581 = vunpack.c.l.b16 %v382
    %v582 = vunpack.c.h.b16 %v382
    %v583 = vunpack.c.l.b16 %v383
    %v584 = vunpack.c.h.b16 %v383
    %v585 = vunpack.c.l.b16 %v384
    %v586 = vunpack.c.h.b16 %v384
    %v587 = vunpack.c.l.b16 %v385
    %v588 = vunpack.c.h.b16 %v385
    %v589 = vunpack.c.l.b16 %v386
    %v590 = vunpack.c.h.b16 %v386
    %v591 = vunpack.c.l.b16 %v387
    %v592 = vunpack.c.h.b16 %v387
    %v593 = vunpack.c.l.b16 %v388
    %v594 = vunpack.c.h.b16 %v388
    %v595 = vunpack.c.l.b16 %v389
    %v596 = vunpack.c.h.b16 %v389
    %v597 = vunpack.c.l.b16 %v390
    %v598 = vunpack.c.h.b16 %v390
    %v599 = vunpack.c.l.b16 %v391
    %v600 = vunpack.c.h.b16 %v391
    %v601 = vunpack.c.l.b16 %v392
    %v602 = vunpack.c.h.b16 %v392
    %v603 = vunpack.c.l.b16 %v393
    %v604 = vunpack.c.h.b16 %v393
    %v605 = vunpack.c.l.b16 %v394
    %v606 = vunpack.c.h.b16 %v394
    %v607 = vunpack.c.l.b16 %v395
    %v608 = vunpack.c.h.b16 %v395
    %v609 = vunpack.c.l.b16 %v396
    %v610 = vunpack.c.h.b16 %v396
    %v611 = vpack.c.b16 %v487, %v483
    %v612 = vpack.c.b16 %v488, %v484
    %v613 = vpack.c.b16 %v489, %v485
    %v614 = vpack.c.b16 %v490, %v486
    %v615 = vpack.c.b16 %v495, %v491
    %v616 = vpack.c.b16 %v496, %v492
    %v617 = vpack.c.b16 %v497, %v493
    %v618 = vpack.c.b16 %v498, %v494
    %v619 = vpack.c.b16 %v503, %v499
    %v620 = vpack.c.b16 %v504, %v500
    %v621 = vpack.c.b16 %v505, %v501
    %v622 = vpack.c.b16 %v506, %v502
    %v623 = vpack.c.b16 %v511, %v507
    %v624 = vpack.c.b16 %v512, %v508
    %v625 = vpack.c.b16 %v513, %v509
    %v626 = vpack.c.b16 %v514, %v510
    %v627 = vpack.c.b16 %v519, %v515
    %v628 = vpack.c.b16 %v520, %v516
    %v629 = vpack.c.b16 %v521, %v517
    %v630 = vpack.c.b16 %v522, %v518
    %v631 = vpack.c.b16 %v527, %v523
    %v632 = vpack.c.b16 %v528, %v524
    %v633 = vpack.c.b16 %v529, %v525
    %v634 = vpack.c.b16 %v530, %v526
    %v635 = vpack.c.b16 %v535, %v531
    %v636 = vpack.c.b16 %v536, %v532
    %v637 = vpack.c.b16 %v537, %v533
    %v638 = vpack.c.b16 %v538, %v534
    %v639 = vpack.c.b16 %v543, %v539
    %v640 = vpack.c.b16 %v544, %v540
    %v641 = vpack.c.b16 %v545, %v541
    %v642 = vpack.c.b16 %v546, %v542
    %v643 = vpack.c.b16 %v551, %v547
    %v644 = vpack.c.b16 %v552, %v548
    %v645 = vpack.c.b16 %v553, %v549
    %v646 = vpack.c.b16 %v554, %v550
    %v647 = vpack.c.b16 %v559, %v555
    %v648 = vpack.c.b16 %v560, %v556
    %v649 = vpack.c.b16 %v561, %v557
    %v650 = vpack.c.b16 %v562, %v558
    %v651 = vpack.c.b16 %v567, %v563
    %v652 = vpack.c.b16 %v568, %v564
    %v653 = vpack.c.b16 %v569, %v565
    %v654 = vpack.c.b16 %v570, %v566
    %v655 = vpack.c.b16 %v575, %v571
    %v656 = vpack.c.b16 %v576, %v572
    %v657 = vpack.c.b16 %v577, %v573
    %v658 = vpack.c.b16 %v578, %v574
    %v659 = vpack.c.b16 %v583, %v579
    %v660 = vpack.c.b16 %v584, %v580
    %v661 = vpack.c.b16 %v585, %v581
    %v662 = vpack.c.b16 %v586, %v582
    %v663 = vpack.c.b16 %v591, %v587
    %v664 = vpack.c.b16 %v592, %v588
    %v665 = vpack.c.b16 %v593, %v589
    %v666 = vpack.c.b16 %v594, %v590
    %v667 = vpack.c.b16 %v599, %v595
    %v668 = vpack.c.b16 %v600, %v596
    %v669 = vpack.c.b16 %v601, %v597
    %v670 = vpack.c.b16 %v602, %v598
    %v671 = vpack.c.b16 %v607, %v603
    %v672 = vpack.c.b16 %v608, %v604
    %v673 = vpack.c.b16 %v609, %v605
    %v674 = vpack.c.b16 %v610, %v606
    %739 = vmatprep.subr.bf16.mxu0 %v640
    %740 = vmatpush1.bf16.msra.mxu0 %v639
    %741 = vmatprep.subr.bf16.mxu0 %v636
    %742 = vmatpush1.bf16.msra.mxu0 %v635
    %743 = vmatprep.subr.bf16.mxu0 %v632
    %744 = vmatpush1.bf16.msra.mxu0 %v631
    %745 = vmatprep.subr.bf16.mxu0 %v628
    %746 = vmatpush1.bf16.msra.mxu0 %v627
    %747 = vmatprep.subr.bf16.mxu0 %v624
    %748 = vmatpush1.bf16.msra.mxu0 %v623
    %749 = vmatprep.subr.bf16.mxu0 %v620
    %750 = vmatpush1.bf16.msra.mxu0 %v619
    %751 = vmatprep.subr.bf16.mxu0 %v616
    %752 = vmatpush1.bf16.msra.mxu0 %v615
    %753 = vmatprep.subr.bf16.mxu0 %v612
    %754 = vmatpush1.bf16.msra.mxu0 %v611
    %755 = vmatprep.subr.bf16.mxu0 %v672
    %756 = vmatpush2.bf16.msra.mxu0 %v671
    %757 = vmatprep.subr.bf16.mxu0 %v668
    %758 = vmatpush2.bf16.msra.mxu0 %v667
    %759 = vmatprep.subr.bf16.mxu0 %v664
    %760 = vmatpush2.bf16.msra.mxu0 %v663
    %761 = vmatprep.subr.bf16.mxu0 %v660
    %762 = vmatpush2.bf16.msra.mxu0 %v659
    %763 = vmatprep.subr.bf16.mxu0 %v656
    %764 = vmatpush2.bf16.msra.mxu0 %v655
    %765 = vmatprep.subr.bf16.mxu0 %v652
    %766 = vmatpush2.bf16.msra.mxu0 %v651
    %767 = vmatprep.subr.bf16.mxu0 %v648
    %768 = vmatpush2.bf16.msra.mxu0 %v647
    %769 = vmatprep.subr.bf16.mxu0 %v644
    %770 = vmatpush2.bf16.msra.mxu0 %v643
    %771 = vmatprep.mubr.bf16.mxu0 %v332
    %772 = vmatmul.mubr.bf16.gmra.mxu0 %v331
    %v773 = vpop.f32.mrf.mxu0
    %v774 = vadd.f32 %v402, %v773
    %v775 = vpop.f32.mrf.mxu0
    %v776 = vadd.f32 %v406, %v775
    %v777 = vpop.f32.mrf.mxu0
    %v778 = vadd.f32 %v402, %v777
    %v779 = vpop.f32.mrf.mxu0
    %v780 = vadd.f32 %v406, %v779
    %781 = vdwg.mxu0
    %782 = vmatprep.subr.bf16.mxu0 %v642
    %783 = vmatpush1.bf16.msra.mxu0 %v641
    %784 = vmatprep.subr.bf16.mxu0 %v638
    %785 = vmatpush1.bf16.msra.mxu0 %v637
    %786 = vmatprep.subr.bf16.mxu0 %v634
    %787 = vmatpush1.bf16.msra.mxu0 %v633
    %788 = vmatprep.subr.bf16.mxu0 %v630
    %789 = vmatpush1.bf16.msra.mxu0 %v629
    %790 = vmatprep.subr.bf16.mxu0 %v626
    %791 = vmatpush1.bf16.msra.mxu0 %v625
    %792 = vmatprep.subr.bf16.mxu0 %v622
    %793 = vmatpush1.bf16.msra.mxu0 %v621
    %794 = vmatprep.subr.bf16.mxu0 %v618
    %795 = vmatpush1.bf16.msra.mxu0 %v617
    %796 = vmatprep.subr.bf16.mxu0 %v614
    %797 = vmatpush1.bf16.msra.mxu0 %v613
    %798 = vmatprep.subr.bf16.mxu0 %v674
    %799 = vmatpush2.bf16.msra.mxu0 %v673
    %800 = vmatprep.subr.bf16.mxu0 %v670
    %801 = vmatpush2.bf16.msra.mxu0 %v669
    %802 = vmatprep.subr.bf16.mxu0 %v666
    %803 = vmatpush2.bf16.msra.mxu0 %v665
    %804 = vmatprep.subr.bf16.mxu0 %v662
    %805 = vmatpush2.bf16.msra.mxu0 %v661
    %806 = vmatprep.subr.bf16.mxu0 %v658
    %807 = vmatpush2.bf16.msra.mxu0 %v657
    %808 = vmatprep.subr.bf16.mxu0 %v654
    %809 = vmatpush2.bf16.msra.mxu0 %v653
    %810 = vmatprep.subr.bf16.mxu0 %v650
    %811 = vmatpush2.bf16.msra.mxu0 %v649
    %812 = vmatprep.subr.bf16.mxu0 %v646
    %813 = vmatpush2.bf16.msra.mxu0 %v645
    %814 = vmatprep.mubr.bf16.mxu0 %v332
    %815 = vmatmul.mubr.bf16.gmra.mxu0 %v331
    %v816 = vpop.f32.mrf.mxu0
    %v817 = vadd.f32 %v410, %v816
    %v818 = vpop.f32.mrf.mxu0
    %v819 = vadd.f32 %v414, %v818
    %v820 = vpop.f32.mrf.mxu0
    %v821 = vadd.f32 %v410, %v820
    %v822 = vpop.f32.mrf.mxu0
    %v823 = vadd.f32 %v414, %v822
    %824 = vdwg.mxu0
    %v825 = vmax.f32 %v774, 0.0
    %v826 = vmax.f32 %v776, 0.0
    %v827 = vmax.f32 %v817, 0.0
    %v828 = vmax.f32 %v819, 0.0
    %v829 = vmax.f32 %v778, 0.0
    %v830 = vmax.f32 %v780, 0.0
    %v831 = vmax.f32 %v821, 0.0
    %v832 = vmax.f32 %v823, 0.0
    %v833 = vpack.c.bf16 %v829, %v825
    %v834 = vpack.c.bf16 %v830, %v826
    %v835 = vpack.c.bf16 %v831, %v827
    %v836 = vpack.c.bf16 %v832, %v828
    %v837 = vld [vmem:[#allocation10] sm:$0xf]
    %v838 = vld [vmem:[#allocation10 + $0x4] sm:$0xf]
    %v839 = vld [vmem:[#allocation10 + $0x8] sm:$0xf]
    %v840 = vld [vmem:[#allocation10 + $0xc] sm:$0xf]
    %v841 = vld [vmem:[#allocation10 + $0x10] sm:$0xf]
    %v842 = vld [vmem:[#allocation10 + $0x14] sm:$0xf]
    %v843 = vld [vmem:[#allocation10 + $0x18] sm:$0xf]
    %v844 = vld [vmem:[#allocation10 + $0x1c] sm:$0xf]
    %v845 = vld [vmem:[#allocation10 + $0x20] sm:$0xf]
    %v846 = vld [vmem:[#allocation10 + $0x24] sm:$0xf]
    %v847 = vld [vmem:[#allocation10 + $0x28] sm:$0xf]
    %v848 = vld [vmem:[#allocation10 + $0x2c] sm:$0xf]
    %v849 = vld [vmem:[#allocation10 + $0x30] sm:$0xf]
    %v850 = vld [vmem:[#allocation10 + $0x34] sm:$0xf]
    %v851 = vld [vmem:[#allocation10 + $0x38] sm:$0xf]
    %v852 = vld [vmem:[#allocation10 + $0x3c] sm:$0xf]
    %v853 = vld [vmem:[#allocation10 + $0x40] sm:$0xf]
    %v854 = vld [vmem:[#allocation10 + $0x44] sm:$0xf]
    %v855 = vld [vmem:[#allocation10 + $0x48] sm:$0xf]
    %v856 = vld [vmem:[#allocation10 + $0x4c] sm:$0xf]
    %v857 = vld [vmem:[#allocation10 + $0x50] sm:$0xf]
    %v858 = vld [vmem:[#allocation10 + $0x54] sm:$0xf]
    %v859 = vld [vmem:[#allocation10 + $0x58] sm:$0xf]
    %v860 = vld [vmem:[#allocation10 + $0x5c] sm:$0xf]
    %v861 = vld [vmem:[#allocation10 + $0x60] sm:$0xf]
    %v862 = vld [vmem:[#allocation10 + $0x64] sm:$0xf]
    %v863 = vld [vmem:[#allocation10 + $0x68] sm:$0xf]
    %v864 = vld [vmem:[#allocation10 + $0x6c] sm:$0xf]
    %v865 = vld [vmem:[#allocation10 + $0x70] sm:$0xf]
    %v866 = vld [vmem:[#allocation10 + $0x74] sm:$0xf]
    %v867 = vld [vmem:[#allocation10 + $0x78] sm:$0xf]
    %v868 = vld [vmem:[#allocation10 + $0x7c] sm:$0xf]
    %v869 = vld [vmem:[#allocation10 + $0x80] sm:$0xf]
    %v870 = vld [vmem:[#allocation10 + $0x84] sm:$0xf]
    %v871 = vld [vmem:[#allocation10 + $0x88] sm:$0xf]
    %v872 = vld [vmem:[#allocation10 + $0x8c] sm:$0xf]
    %v873 = vld [vmem:[#allocation10 + $0x90] sm:$0xf]
    %v874 = vld [vmem:[#allocation10 + $0x94] sm:$0xf]
    %v875 = vld [vmem:[#allocation10 + $0x98] sm:$0xf]
    %v876 = vld [vmem:[#allocation10 + $0x9c] sm:$0xf]
    %v877 = vld [vmem:[#allocation10 + $0xa0] sm:$0xf]
    %v878 = vld [vmem:[#allocation10 + $0xa4] sm:$0xf]
    %v879 = vld [vmem:[#allocation10 + $0xa8] sm:$0xf]
    %v880 = vld [vmem:[#allocation10 + $0xac] sm:$0xf]
    %v881 = vld [vmem:[#allocation10 + $0xb0] sm:$0xf]
    %v882 = vld [vmem:[#allocation10 + $0xb4] sm:$0xf]
    %v883 = vld [vmem:[#allocation10 + $0xb8] sm:$0xf]
    %v884 = vld [vmem:[#allocation10 + $0xbc] sm:$0xf]
    %v885 = vld [vmem:[#allocation10 + $0xc0] sm:$0xf]
    %v886 = vld [vmem:[#allocation10 + $0xc4] sm:$0xf]
    %v887 = vld [vmem:[#allocation10 + $0xc8] sm:$0xf]
    %v888 = vld [vmem:[#allocation10 + $0xcc] sm:$0xf]
    %v889 = vld [vmem:[#allocation10 + $0xd0] sm:$0xf]
    %v890 = vld [vmem:[#allocation10 + $0xd4] sm:$0xf]
    %v891 = vld [vmem:[#allocation10 + $0xd8] sm:$0xf]
    %v892 = vld [vmem:[#allocation10 + $0xdc] sm:$0xf]
    %v893 = vld [vmem:[#allocation10 + $0xe0] sm:$0xf]
    %v894 = vld [vmem:[#allocation10 + $0xe4] sm:$0xf]
    %v895 = vld [vmem:[#allocation10 + $0xe8] sm:$0xf]
    %v896 = vld [vmem:[#allocation10 + $0xec] sm:$0xf]
    %v897 = vld [vmem:[#allocation10 + $0xf0] sm:$0xf]
    %v898 = vld [vmem:[#allocation10 + $0xf4] sm:$0xf]
    %v899 = vld [vmem:[#allocation10 + $0xf8] sm:$0xf]
    %v900 = vld [vmem:[#allocation10 + $0xfc] sm:$0xf]
    %v901 = vld [vmem:[%s8] sm:$0x1]
    %v903 = vlaneseq
    %v904 = vshrl.u32 %v903, 7
    %v905 = vsub.s32 0, %v904
    %v906 = vrot.slane %v901, %v905
    %v972 = vunpack.c.l.b16 %v837
    %v973 = vunpack.c.l.b16 %v838
    %v974 = vunpack.c.l.b16 %v839
    %v975 = vunpack.c.l.b16 %v840
    %v976 = vunpack.c.l.b16 %v841
    %v977 = vunpack.c.l.b16 %v842
    %v978 = vunpack.c.l.b16 %v843
    %v979 = vunpack.c.l.b16 %v844
    %v980 = vunpack.c.l.b16 %v845
    %v981 = vunpack.c.l.b16 %v846
    %v982 = vunpack.c.l.b16 %v847
    %v983 = vunpack.c.l.b16 %v848
    %v984 = vunpack.c.l.b16 %v849
    %v985 = vunpack.c.l.b16 %v850
    %v986 = vunpack.c.l.b16 %v851
    %v987 = vunpack.c.l.b16 %v852
    %v988 = vunpack.c.l.b16 %v853
    %v989 = vunpack.c.l.b16 %v854
    %v990 = vunpack.c.l.b16 %v855
    %v991 = vunpack.c.l.b16 %v856
    %v992 = vunpack.c.l.b16 %v857
    %v993 = vunpack.c.l.b16 %v858
    %v994 = vunpack.c.l.b16 %v859
    %v995 = vunpack.c.l.b16 %v860
    %v996 = vunpack.c.l.b16 %v861
    %v997 = vunpack.c.l.b16 %v862
    %v998 = vunpack.c.l.b16 %v863
    %v999 = vunpack.c.l.b16 %v864
    %v1000 = vunpack.c.l.b16 %v865
    %v1001 = vunpack.c.l.b16 %v866
    %v1002 = vunpack.c.l.b16 %v867
    %v1003 = vunpack.c.l.b16 %v868
    %v1004 = vunpack.c.l.b16 %v869
    %v1005 = vunpack.c.l.b16 %v870
    %v1006 = vunpack.c.l.b16 %v871
    %v1007 = vunpack.c.l.b16 %v872
    %v1008 = vunpack.c.l.b16 %v873
    %v1009 = vunpack.c.l.b16 %v874
    %v1010 = vunpack.c.l.b16 %v875
    %v1011 = vunpack.c.l.b16 %v876
    %v1012 = vunpack.c.l.b16 %v877
    %v1013 = vunpack.c.l.b16 %v878
    %v1014 = vunpack.c.l.b16 %v879
    %v1015 = vunpack.c.l.b16 %v880
    %v1016 = vunpack.c.l.b16 %v881
    %v1017 = vunpack.c.l.b16 %v882
    %v1018 = vunpack.c.l.b16 %v883
    %v1019 = vunpack.c.l.b16 %v884
    %v1020 = vunpack.c.l.b16 %v885
    %v1021 = vunpack.c.l.b16 %v886
    %v1022 = vunpack.c.l.b16 %v887
    %v1023 = vunpack.c.l.b16 %v888
    %v1024 = vunpack.c.l.b16 %v889
    %v1025 = vunpack.c.l.b16 %v890
    %v1026 = vunpack.c.l.b16 %v891
    %v1027 = vunpack.c.l.b16 %v892
    %v1028 = vunpack.c.l.b16 %v893
    %v1029 = vunpack.c.l.b16 %v894
    %v1030 = vunpack.c.l.b16 %v895
    %v1031 = vunpack.c.l.b16 %v896
    %v1032 = vunpack.c.l.b16 %v897
    %v1033 = vunpack.c.l.b16 %v898
    %v1034 = vunpack.c.l.b16 %v899
    %v1035 = vunpack.c.l.b16 %v900
    %v1036 = vpack.c.b16 %v973, %v972
    %v1037 = vpack.c.b16 %v975, %v974
    %v1038 = vpack.c.b16 %v977, %v976
    %v1039 = vpack.c.b16 %v979, %v978
    %v1040 = vpack.c.b16 %v981, %v980
    %v1041 = vpack.c.b16 %v983, %v982
    %v1042 = vpack.c.b16 %v985, %v984
    %v1043 = vpack.c.b16 %v987, %v986
    %v1044 = vpack.c.b16 %v989, %v988
    %v1045 = vpack.c.b16 %v991, %v990
    %v1046 = vpack.c.b16 %v993, %v992
    %v1047 = vpack.c.b16 %v995, %v994
    %v1048 = vpack.c.b16 %v997, %v996
    %v1049 = vpack.c.b16 %v999, %v998
    %v1050 = vpack.c.b16 %v1001, %v1000
    %v1051 = vpack.c.b16 %v1003, %v1002
    %v1052 = vpack.c.b16 %v1005, %v1004
    %v1053 = vpack.c.b16 %v1007, %v1006
    %v1054 = vpack.c.b16 %v1009, %v1008
    %v1055 = vpack.c.b16 %v1011, %v1010
    %v1056 = vpack.c.b16 %v1013, %v1012
    %v1057 = vpack.c.b16 %v1015, %v1014
    %v1058 = vpack.c.b16 %v1017, %v1016
    %v1059 = vpack.c.b16 %v1019, %v1018
    %v1060 = vpack.c.b16 %v1021, %v1020
    %v1061 = vpack.c.b16 %v1023, %v1022
    %v1062 = vpack.c.b16 %v1025, %v1024
    %v1063 = vpack.c.b16 %v1027, %v1026
    %v1064 = vpack.c.b16 %v1029, %v1028
    %v1065 = vpack.c.b16 %v1031, %v1030
    %v1066 = vpack.c.b16 %v1033, %v1032
    %v1067 = vpack.c.b16 %v1035, %v1034
    %1100 = vmatprep.subr.bf16.mxu0 0
    %1101 = vmatpush1.bf16.msra.mxu0 %v1043
    %1102 = vmatprep.subr.bf16.mxu0 0
    %1103 = vmatpush1.bf16.msra.mxu0 %v1042
    %1104 = vmatprep.subr.bf16.mxu0 0
    %1105 = vmatpush1.bf16.msra.mxu0 %v1041
    %1106 = vmatprep.subr.bf16.mxu0 0
    %1107 = vmatpush1.bf16.msra.mxu0 %v1040
    %1108 = vmatprep.subr.bf16.mxu0 0
    %1109 = vmatpush1.bf16.msra.mxu0 %v1039
    %1110 = vmatprep.subr.bf16.mxu0 0
    %1111 = vmatpush1.bf16.msra.mxu0 %v1038
    %1112 = vmatprep.subr.bf16.mxu0 0
    %1113 = vmatpush1.bf16.msra.mxu0 %v1037
    %1114 = vmatprep.subr.bf16.mxu0 0
    %1115 = vmatpush1.bf16.msra.mxu0 %v1036
    %1116 = vmatprep.subr.bf16.mxu0 0
    %1117 = vmatpush2.bf16.msra.mxu0 %v1051
    %1118 = vmatprep.subr.bf16.mxu0 0
    %1119 = vmatpush2.bf16.msra.mxu0 %v1050
    %1120 = vmatprep.subr.bf16.mxu0 0
    %1121 = vmatpush2.bf16.msra.mxu0 %v1049
    %1122 = vmatprep.subr.bf16.mxu0 0
    %1123 = vmatpush2.bf16.msra.mxu0 %v1048
    %1124 = vmatprep.subr.bf16.mxu0 0
    %1125 = vmatpush2.bf16.msra.mxu0 %v1047
    %1126 = vmatprep.subr.bf16.mxu0 0
    %1127 = vmatpush2.bf16.msra.mxu0 %v1046
    %1128 = vmatprep.subr.bf16.mxu0 0
    %1129 = vmatpush2.bf16.msra.mxu0 %v1045
    %1130 = vmatprep.subr.bf16.mxu0 0
    %1131 = vmatpush2.bf16.msra.mxu0 %v1044
    %1132 = vmatprep.mubr.bf16.mxu0 %v834
    %1133 = vmatmul.mubr.bf16.gmra.mxu0 %v833
    %v1134 = vpop.f32.mrf.mxu0
    %v1135 = vadd.f32 %v906, %v1134
    %v1136 = vpop.f32.mrf.mxu0
    %v1137 = vpop.f32.mrf.mxu0
    %v1138 = vadd.f32 %v906, %v1137
    %v1139 = vpop.f32.mrf.mxu0
    %1140 = vdwg.mxu0
    %1141 = vmatprep.subr.bf16.mxu0 0
    %1142 = vmatpush1.bf16.msra.mxu0 %v1059
    %1143 = vmatprep.subr.bf16.mxu0 0
    %1144 = vmatpush1.bf16.msra.mxu0 %v1058
    %1145 = vmatprep.subr.bf16.mxu0 0
    %1146 = vmatpush1.bf16.msra.mxu0 %v1057
    %1147 = vmatprep.subr.bf16.mxu0 0
    %1148 = vmatpush1.bf16.msra.mxu0 %v1056
    %1149 = vmatprep.subr.bf16.mxu0 0
    %1150 = vmatpush1.bf16.msra.mxu0 %v1055
    %1151 = vmatprep.subr.bf16.mxu0 0
    %1152 = vmatpush1.bf16.msra.mxu0 %v1054
    %1153 = vmatprep.subr.bf16.mxu0 0
    %1154 = vmatpush1.bf16.msra.mxu0 %v1053
    %1155 = vmatprep.subr.bf16.mxu0 0
    %1156 = vmatpush1.bf16.msra.mxu0 %v1052
    %1157 = vmatprep.subr.bf16.mxu0 0
    %1158 = vmatpush2.bf16.msra.mxu0 %v1067
    %1159 = vmatprep.subr.bf16.mxu0 0
    %1160 = vmatpush2.bf16.msra.mxu0 %v1066
    %1161 = vmatprep.subr.bf16.mxu0 0
    %1162 = vmatpush2.bf16.msra.mxu0 %v1065
    %1163 = vmatprep.subr.bf16.mxu0 0
    %1164 = vmatpush2.bf16.msra.mxu0 %v1064
    %1165 = vmatprep.subr.bf16.mxu0 0
    %1166 = vmatpush2.bf16.msra.mxu0 %v1063
    %1167 = vmatprep.subr.bf16.mxu0 0
    %1168 = vmatpush2.bf16.msra.mxu0 %v1062
    %1169 = vmatprep.subr.bf16.mxu0 0
    %1170 = vmatpush2.bf16.msra.mxu0 %v1061
    %1171 = vmatprep.subr.bf16.mxu0 0
    %1172 = vmatpush2.bf16.msra.mxu0 %v1060
    %1173 = vmatprep.mubr.bf16.mxu0 %v836
    %1174 = vmatmul.mubr.bf16.gmra.mxu0 %v835
    %v1175 = vpop.f32.mrf.mxu0
    %v1176 = vadd.f32 %v1135, %v1175
    %v1177 = vpop.f32.mrf.mxu0
    %v1178 = vpop.f32.mrf.mxu0
    %v1179 = vadd.f32 %v1138, %v1178
    %v1180 = vpop.f32.mrf.mxu0
    %1181 = vdwg.mxu0
    %v1182 = vpack.c.bf16 %v1179, %v1176
    %v1184 = vunpack.c.l.b16 %v1182
    %v1185 = vunpack.c.h.b16 %v1182
    %v1186 = vpack.c.b16 %v1184, %v1184
    %v1187 = vpack.c.b16 %v1185, %v1185
    %1190 = vst [vmem:[#allocation11] sm:$0xf] %v1186
    %1191 = vst [vmem:[#allocation11 + $0x4] sm:$0xf] %v1187
    // Predicated region
    $region58: #{tpu_custom_call.1} parent=1 // pred_check
      _
    $region59: #{tpu_custom_call.1} parent=1 // pred_check_branch
      %1193 = sbr.rel (0) target = $region61
    $region60: #{tpu_custom_call.1} parent=1 // pred_region
      %s1195 = ssub.s32 128, 128
      %1196 = vsyncadd [#allocation4], %s1195
      %s1197 = sshll.u32 [#allocation11], 4
      %s1198 = int_to_ptr.vmem [resolvable:$true] %s1197
      %1203 = dma.vmem_to_hbm [thread:$0]  %s1198, 128, %s9, [#allocation4], 64, 64, 4
    $region61: #{tpu_custom_call.1} parent=1 // pred_fallthru
      _
    // Predicated region
    $region62: #{tpu_custom_call.1} parent=1 // pred_check
      _
    $region63: #{tpu_custom_call.1} parent=1 // pred_check_branch
      %1205 = sbr.rel (0) target = $region65
    $region64: #{tpu_custom_call.1} parent=1 // pred_region
      %1206 = dma.done [#allocation4], 128
    $region65: #{tpu_custom_call.1} parent=1 // pred_fallthru
      _
    %1207 = vsyncpa [#allocation3], 1
    %1208 = vsyncpa [#allocation6], 1
    %1209 = vsyncpa [#allocation9], 1
    %1210 = vsyncpa [#allocation4], 1

</llo_original>
